<compile_context>
chip_gen: v5e
topology: v5e:2x2
jax: 0.10.0
libtpu: 0.0.40
codegen_flags: <defaults>
</compile_context>

<pallas_src>
import functools

import jax
import jax.numpy as jnp
from jax import lax
from jax.experimental import pallas as pl
from jax.experimental.pallas import tpu as pltpu


def _round_up(v: int, m: int) -> int:
    return (v + m - 1) // m * m


def _kmeans_kernel(x_ref, c0_ref, clusters_ref, centroids_ref, npoints_ref,
                   cent_ref, bias_ref, sums_ref, counts_ref, *,
                   k, kp, n, tn, mxu_dtype, mask_tail):
    f32 = jnp.float32
    is_f32 = jnp.dtype(mxu_dtype) == jnp.dtype(jnp.float32)
    it = pl.program_id(0)
    nt = pl.program_id(1)
    last_it = pl.num_programs(0) - 1
    last_nt = pl.num_programs(1) - 1

    # Cluster-id column (Kp, 1); broadcast against (Kp, TN) — never materialize
    # a (Kp, TN) iota.
    col_k = lax.broadcasted_iota(jnp.int32, (kp, 1), 0)
    col_k_f = col_k.astype(f32)
    pad_row = col_k >= k                                      # padded cluster rows
    pad_inf = jnp.where(pad_row, jnp.inf, 0.0).astype(f32)    # (Kp, 1)

    # --- first grid step: load initial centroids + their distance bias -------
    @pl.when(jnp.logical_and(it == 0, nt == 0))
    def _init():
        c0 = c0_ref[...]                                      # (Kp, D) f32
        cent_ref[...] = c0
        bias_ref[...] = 0.5 * jnp.sum(c0 * c0, axis=-1, keepdims=True) + pad_inf

    # --- start of each N sweep: zero the accumulators -------------------------
    @pl.when(nt == 0)
    def _zero():
        sums_ref[...] = jnp.zeros_like(sums_ref)
        counts_ref[...] = jnp.zeros_like(counts_ref)

    # --- assignment pass for this (TN, D) tile --------------------------------
    x = x_ref[...]                                            # storage == MXU dtype
    c_mx = cent_ref[...].astype(mxu_dtype)
    # argmin_k ||x - c_k||^2 == argmin_k (0.5||c_k||^2 - x.c_k); (K, N) layout,
    # no operand transposes.
    xc = lax.dot_general(c_mx, x, (((1,), (1,)), ((), ())),
                         preferred_element_type=f32)          # (Kp, TN)
    dist = bias_ref[...] - xc                                 # (Kp, TN); pad/empty rows +inf

    # argmin over the (sublane) cluster axis, first-index tie break.
    dmin = jnp.min(dist, axis=0, keepdims=True)               # (1, TN)
    ids = jnp.where(dist <= dmin, col_k_f, float(kp))         # (Kp, TN)
    clusters_f = jnp.min(ids, axis=0, keepdims=True)          # (1, TN)
    onehot = col_k_f == clusters_f                            # (Kp, TN) bool

    if mask_tail:
        # Zero padded points out of the accumulators (last tile only has them,
        # but the compare is cheap and uniform).
        gcol = nt * tn + lax.broadcasted_iota(jnp.int32, (1, tn), 1)
        onehot = jnp.logical_and(onehot, gcol < n)

    oh_f = onehot.astype(f32)
    counts_ref[...] += jnp.sum(oh_f, axis=1, keepdims=True)   # lane reduce (XLU)
    oh_mx = oh_f if is_f32 else onehot.astype(mxu_dtype)
    # scatter_add_ == plain (Kp,TN)@(TN,D) MXU matmul into the f32 accumulator.
    sums_ref[...] += lax.dot_general(oh_mx, x, (((1,), (0,)), ((), ())),
                                     preferred_element_type=f32)

    clusters_ref[...] = clusters_f.astype(jnp.int32)          # lane-dense (1, TN)

    # --- end of each N sweep: new working centroids + bias --------------------
    @pl.when(nt == last_nt)
    def _finalize():
        counts = counts_ref[...]
        empty = counts == 0.0
        # Clamp empty clusters to a 0 centroid (never NaN) and push their bias
        # to +inf so they can never win the next argmin (no NaN collapse).
        new_c = sums_ref[...] / jnp.where(empty, 1.0, counts)
        cent_ref[...] = new_c
        bias_ref[...] = (0.5 * jnp.sum(new_c * new_c, axis=-1, keepdims=True)
                         + jnp.where(jnp.logical_or(empty, pad_row),
                                     jnp.inf, 0.0).astype(f32))

    # --- very last grid step: emit outputs (torch parity) ---------------------
    @pl.when(jnp.logical_and(it == last_it, nt == last_nt))
    def _emit():
        counts = counts_ref[...]
        # torch: `centroids /= n_points` with no clamp -> empty clusters NaN.
        centroids_ref[...] = (sums_ref[...] / counts).astype(centroids_ref.dtype)
        npoints_ref[...] = counts


def kmeans_pallas(x, k: int = 10, n_iters: int = 10, mxu_dtype=jnp.float32):
    """Pallas equivalent of `kmeans(x, K, niters, centroids=None)`.

    `mxu_dtype=jnp.bfloat16` stores/streams x as bf16 and feeds both matmuls
    bf16 operands (f32 accumulate): ~2x MXU throughput and half the x HBM/VMEM
    bytes, at the cost that near-tie assignments may differ from the f32 torch
    reference.  Default f32 matches the torch float32 reference.
    """
    n, d = x.shape
    assert n >= k, "need at least K points (centroids init = x[:K])"
    assert n_iters >= 1
    kp = max(_round_up(k, 8), 8)

    x32 = x.astype(jnp.float32)
    x_store = x32 if jnp.dtype(mxu_dtype) == jnp.dtype(jnp.float32) \
        else x32.astype(mxu_dtype)
    x_item = jnp.dtype(x_store.dtype).itemsize

    # ---- generation-aware VMEM budget and N-tile size ------------------------
    try:
        info = pltpu.get_tpu_info()
        vmem_cap = int(getattr(info, "vmem_capacity_bytes", 0)) or (64 << 20)
    except Exception:  # e.g. no TPU info available at trace time
        vmem_cap = 64 << 20
    vmem_limit = max(32 << 20, int(vmem_cap * 0.85))

    lane_d = _round_up(d, 128)                     # VMEM lane-padded row width
    # Resident: cent/bias/sums/counts scratch, c0 input, centroids/npoints out.
    fixed = 6 * kp * lane_d * 4 + (4 << 20)        # + compiler scratch margin
    # Per x-column: double-buffered x tile + ~4 transient (Kp, TN) f32 passes
    # + double-buffered clusters tile.
    per_col = 2 * lane_d * x_item + 4 * kp * 4 + 2 * 4
    tn_cap = max((vmem_limit - fixed) // per_col, 128)

    n8 = _round_up(n, 8)
    if tn_cap >= n8:
        tn = n8                                    # single resident tile
    else:
        tn = min(max(128, (tn_cap // 128) * 128), 8192)
    np_pad = _round_up(n, tn)
    num_tiles = np_pad // tn
    mask_tail = np_pad != n

    if np_pad > n:
        x_store = jnp.concatenate(
            [x_store, jnp.zeros((np_pad - n, d), x_store.dtype)], axis=0)

    c0 = x32[:k, :]
    if kp > k:
        c0 = jnp.concatenate([c0, jnp.zeros((kp - k, d), jnp.float32)], axis=0)

    kernel = functools.partial(
        _kmeans_kernel, k=k, kp=kp, n=n, tn=tn,
        mxu_dtype=mxu_dtype, mask_tail=mask_tail)

    clusters, centroids, n_points = pl.pallas_call(
        kernel,
        grid=(n_iters, num_tiles),
        out_shape=(
            jax.ShapeDtypeStruct((1, np_pad), jnp.int32),   # clusters (torch: int64)
            jax.ShapeDtypeStruct((kp, d), jnp.float32),     # padded centroids
            jax.ShapeDtypeStruct((kp, 1), jnp.float32),     # padded counts
        ),
        in_specs=[
            pl.BlockSpec((tn, d), lambda it, nt: (nt, 0)),  # streamed x tiles
            pl.BlockSpec((kp, d), lambda it, nt: (0, 0)),   # resident c0
        ],
        out_specs=(
            pl.BlockSpec((1, tn), lambda it, nt: (0, nt)),
            pl.BlockSpec((kp, d), lambda it, nt: (0, 0)),
            pl.BlockSpec((kp, 1), lambda it, nt: (0, 0)),
        ),
        scratch_shapes=[
            pltpu.VMEM((kp, d), jnp.float32),   # working centroids
            pltpu.VMEM((kp, 1), jnp.float32),   # 0.5||c||^2 + (+inf pad/empty)
            pltpu.VMEM((kp, d), jnp.float32),   # cluster-sum accumulator
            pltpu.VMEM((kp, 1), jnp.float32),   # count accumulator
        ],
        compiler_params=pltpu.CompilerParams(
            dimension_semantics=("arbitrary", "arbitrary"),
            vmem_limit_bytes=int(vmem_limit)),
    )(x_store, c0)

    return (clusters[0, :n],
            centroids[:k, :].astype(x.dtype),
            n_points[:k, 0])


class KMeansPallas:
    """Mirror of the nn.Module forward (first call: uninitialized path)."""

    def __init__(self, k: int, n_iters: int = 10, mxu_dtype=jnp.float32):
        self.k = k
        self.n_iters = n_iters
        self.mxu_dtype = mxu_dtype
        # nn.Parameter buffers (k, 1) — deterministic zero init, as in __init__.
        self._centroids = jnp.zeros((k, 1), jnp.float32)
        self._n_points = jnp.zeros((k, 1), jnp.float32)
        # TODO(synk): stateful training-time buffer updates (_centroids /
        # _n_points scatter_add accumulation across calls) are host-side module
        # state, not part of the returned forward values; not replicated here.

    def __call__(self, x):
        # Uninitialized module -> centroids=None path inside kmeans().
        return kmeans_pallas(x, self.k, self.n_iters, self.mxu_dtype)


def _kmeans_ref(x, k, n_iters):
    """Pure-JAX reference matching the torch/KeOps semantics (no empty clusters)."""
    c = x[:k, :]
    for _ in range(n_iters):
        d2 = jnp.sum((x[:, None, :] - c[None, :, :]) ** 2, axis=-1)   # (N, K)
        cl = jnp.argmin(d2, axis=1)
        oh = jax.nn.one_hot(cl, k, dtype=jnp.float32)                 # (N, K)
        sums = oh.T @ x
        cnt = oh.sum(axis=0)[:, None]
        c = sums / cnt
    return cl, c, cnt[:, 0]


if __name__ == "__main__":
    key = jax.random.PRNGKey(0)
    N, D, K, NITERS = 64, 32, 8, 10
    x = jax.random.normal(key, (N, D), dtype=jnp.float32)

    model = KMeansPallas(k=K, n_iters=NITERS)
    clusters, centroids, n_points = model(x)
    jax.block_until_ready((clusters, centroids, n_points))

    assert clusters.shape == (N,)
    assert centroids.shape == (K, D)
    assert n_points.shape == (K,)
    assert int(n_points.sum()) == N

    # Compare against the pure-JAX reference (only when no cluster went empty,
    # since the torch reference NaN-poisons empty clusters).
    cl_ref, c_ref, np_ref = _kmeans_ref(x, K, NITERS)
    jax.block_until_ready((cl_ref, c_ref, np_ref))
    if bool(jnp.all(np_ref > 0)):
        assert bool(jnp.all(clusters == cl_ref.astype(clusters.dtype)))
        assert bool(jnp.all(n_points == np_ref))
        assert bool(jnp.allclose(centroids, c_ref, rtol=1e-4, atol=1e-4))

    print("KERNEL_OK")
</pallas_src>

<mosaic_0001>
module attributes {stable_mosaic.version = 11 : i64} {
  func.func @_kmeans_kernel(%arg0: i32, %arg1: i32, %arg2: memref<64x32xf32, #tpu.memory_space<vmem>>, %arg3: memref<8x32xf32, #tpu.memory_space<vmem>>, %arg4: memref<1x64xi32, #tpu.memory_space<vmem>>, %arg5: memref<8x32xf32, #tpu.memory_space<vmem>>, %arg6: memref<8x1xf32, #tpu.memory_space<vmem>>, %arg7: memref<8x32xf32, #tpu.memory_space<vmem>>, %arg8: memref<8x1xf32, #tpu.memory_space<vmem>>, %arg9: memref<8x32xf32, #tpu.memory_space<vmem>>, %arg10: memref<8x1xf32, #tpu.memory_space<vmem>>) attributes {dimension_semantics = [#tpu.dimension_semantics<arbitrary>, #tpu.dimension_semantics<arbitrary>], iteration_bounds = array<i64: 10, 1>, scalar_prefetch = 0 : i64, scratch_operands = 4 : i64, tpu.core_type = #tpu.core_type<tc>, window_params = [{transform_indices = @transform_0, window_bounds = array<i64: 64, 32>}, {pipeline_mode = #tpu.pipeline_mode<synchronous>, transform_indices = @transform_1, window_bounds = array<i64: 8, 32>}, {transform_indices = @transform_2, window_bounds = array<i64: 1, 64>}, {pipeline_mode = #tpu.pipeline_mode<synchronous>, transform_indices = @transform_3, window_bounds = array<i64: 8, 32>}, {pipeline_mode = #tpu.pipeline_mode<synchronous>, transform_indices = @transform_4, window_bounds = array<i64: 8, 1>}]} {
    %0 = tpu.iota {dimensions = array<i32: 0>} : vector<8x1xi32>
    %1 = arith.sitofp %0 : vector<8x1xi32> to vector<8x1xf32>
    %c8_i32 = arith.constant 8 : i32
    %2 = vector.broadcast %c8_i32 : i32 to vector<8x1xi32>
    %3 = arith.cmpi sge, %0, %2 : vector<8x1xi32>
    %cst = arith.constant 0x7F800000 : f32
    %cst_0 = arith.constant 0.000000e+00 : f32
    %4 = vector.broadcast %cst : f32 to vector<8x1xf32>
    %5 = vector.broadcast %cst_0 : f32 to vector<8x1xf32>
    %6 = arith.select %3, %4, %5 : vector<8x1xi1>, vector<8x1xf32>
    %c0_i32 = arith.constant 0 : i32
    %7 = arith.cmpi eq, %arg0, %c0_i32 : i32
    %c0_i32_1 = arith.constant 0 : i32
    %8 = arith.cmpi eq, %arg1, %c0_i32_1 : i32
    %9 = arith.andi %7, %8 : i1
    %10 = arith.extui %9 : i1 to i32
    %c0_i32_2 = arith.constant 0 : i32
    %11 = arith.cmpi ne, %10, %c0_i32_2 : i32
    scf.if %11 {
      %c0_30 = arith.constant 0 : index
      %c0_31 = arith.constant 0 : index
      %55 = vector.load %arg3[%c0_30, %c0_31] : memref<8x32xf32, #tpu.memory_space<vmem>>, vector<8x32xf32>
      %c0_32 = arith.constant 0 : index
      %c0_33 = arith.constant 0 : index
      %56 = vector.load %arg7[%c0_32, %c0_33] : memref<8x32xf32, #tpu.memory_space<vmem>>, vector<8x32xf32>
      tpu.vector_store %arg7[%c0_32, %c0_33], %55 {strides = array<i32>} : memref<8x32xf32, #tpu.memory_space<vmem>>, vector<8x32xf32>,
      %57 = arith.mulf %55, %55 : vector<8x32xf32>
      %cst_34 = arith.constant dense<0.000000e+00> : vector<8xf32>
      %58 = vector.multi_reduction <add>, %57, %cst_34 [1] : vector<8x32xf32> to vector<8xf32>
      %59 = vector.shape_cast %58 : vector<8xf32> to vector<8x1xf32>
      %cst_35 = arith.constant 5.000000e-01 : f32
      %60 = vector.broadcast %cst_35 : f32 to vector<8x1xf32>
      %61 = arith.mulf %60, %59 : vector<8x1xf32>
      %62 = arith.addf %61, %6 : vector<8x1xf32>
      %c0_36 = arith.constant 0 : index
      %c0_37 = arith.constant 0 : index
      %63 = vector.load %arg8[%c0_36, %c0_37] : memref<8x1xf32, #tpu.memory_space<vmem>>, vector<8x1xf32>
      tpu.vector_store %arg8[%c0_36, %c0_37], %62 {strides = array<i32>} : memref<8x1xf32, #tpu.memory_space<vmem>>, vector<8x1xf32>,
    } else {
    }
    %c0_i32_3 = arith.constant 0 : i32
    %12 = arith.cmpi eq, %arg1, %c0_i32_3 : i32
    %13 = arith.extui %12 : i1 to i32
    %c0_i32_4 = arith.constant 0 : i32
    %14 = arith.cmpi ne, %13, %c0_i32_4 : i32
    scf.if %14 {
      %cst_30 = arith.constant 0.000000e+00 : f32
      %55 = vector.broadcast %cst_30 : f32 to vector<8x32xf32>
      %c0_31 = arith.constant 0 : index
      %c0_32 = arith.constant 0 : index
      %56 = vector.load %arg9[%c0_31, %c0_32] : memref<8x32xf32, #tpu.memory_space<vmem>>, vector<8x32xf32>
      tpu.vector_store %arg9[%c0_31, %c0_32], %55 {strides = array<i32>} : memref<8x32xf32, #tpu.memory_space<vmem>>, vector<8x32xf32>,
      %cst_33 = arith.constant 0.000000e+00 : f32
      %57 = vector.broadcast %cst_33 : f32 to vector<8x1xf32>
      %c0_34 = arith.constant 0 : index
      %c0_35 = arith.constant 0 : index
      %58 = vector.load %arg10[%c0_34, %c0_35] : memref<8x1xf32, #tpu.memory_space<vmem>>, vector<8x1xf32>
      tpu.vector_store %arg10[%c0_34, %c0_35], %57 {strides = array<i32>} : memref<8x1xf32, #tpu.memory_space<vmem>>, vector<8x1xf32>,
    } else {
    }
    %c0 = arith.constant 0 : index
    %c0_5 = arith.constant 0 : index
    %15 = vector.load %arg2[%c0, %c0_5] : memref<64x32xf32, #tpu.memory_space<vmem>>, vector<64x32xf32>
    %c0_6 = arith.constant 0 : index
    %c0_7 = arith.constant 0 : index
    %16 = vector.load %arg7[%c0_6, %c0_7] : memref<8x32xf32, #tpu.memory_space<vmem>>, vector<8x32xf32>
    %cst_8 = arith.constant dense<0.000000e+00> : vector<8x64xf32>
    %17 = tpu.matmul %16, %15, %cst_8 {dimension_numbers = #tpu.dot_dimension_numbers<[1], [1], [0], [0], [0, 0, 1, 0], [], []>} : vector<8x32xf32>, vector<64x32xf32>, vector<8x64xf32> -> vector<8x64xf32>
    %c0_9 = arith.constant 0 : index
    %c0_10 = arith.constant 0 : index
    %18 = vector.load %arg8[%c0_9, %c0_10] : memref<8x1xf32, #tpu.memory_space<vmem>>, vector<8x1xf32>
    %19 = vector.broadcast %18 : vector<8x1xf32> to vector<8x64xf32>
    %20 = arith.subf %19, %17 : vector<8x64xf32>
    %cst_11 = arith.constant dense<0x7F800000> : vector<64xf32>
    %21 = vector.multi_reduction <minimumf>, %20, %cst_11 [0] : vector<8x64xf32> to vector<64xf32>
    %22 = vector.shape_cast %21 : vector<64xf32> to vector<1x64xf32>
    %23 = vector.broadcast %22 : vector<1x64xf32> to vector<8x64xf32>
    %24 = arith.cmpf ole, %20, %23 : vector<8x64xf32>
    %cst_12 = arith.constant 8.000000e+00 : f32
    %25 = vector.shape_cast %1 : vector<8x1xf32> to vector<8x1xf32>
    %26 = vector.broadcast %25 : vector<8x1xf32> to vector<8x64xf32>
    %27 = vector.broadcast %cst_12 : f32 to vector<8x64xf32>
    %28 = arith.select %24, %26, %27 : vector<8x64xi1>, vector<8x64xf32>
    %cst_13 = arith.constant dense<0x7F800000> : vector<64xf32>
    %29 = vector.multi_reduction <minimumf>, %28, %cst_13 [0] : vector<8x64xf32> to vector<64xf32>
    %30 = vector.shape_cast %29 : vector<64xf32> to vector<1x64xf32>
    %31 = vector.broadcast %1 : vector<8x1xf32> to vector<8x64xf32>
    %32 = vector.broadcast %30 : vector<1x64xf32> to vector<8x64xf32>
    %33 = arith.cmpf oeq, %31, %32 : vector<8x64xf32>
    %34 = arith.extui %33 : vector<8x64xi1> to vector<8x64xi32>
    %35 = arith.sitofp %34 : vector<8x64xi32> to vector<8x64xf32>
    %c0_14 = arith.constant 0 : index
    %c0_15 = arith.constant 0 : index
    %36 = vector.load %arg10[%c0_14, %c0_15] : memref<8x1xf32, #tpu.memory_space<vmem>>, vector<8x1xf32>
    %cst_16 = arith.constant dense<0.000000e+00> : vector<8xf32>
    %37 = vector.multi_reduction <add>, %35, %cst_16 [1] : vector<8x64xf32> to vector<8xf32>
    %38 = vector.shape_cast %37 : vector<8xf32> to vector<8x1xf32>
    %39 = arith.addf %36, %38 : vector<8x1xf32>
    %c0_17 = arith.constant 0 : index
    %c0_18 = arith.constant 0 : index
    %40 = vector.load %arg10[%c0_17, %c0_18] : memref<8x1xf32, #tpu.memory_space<vmem>>, vector<8x1xf32>
    tpu.vector_store %arg10[%c0_17, %c0_18], %39 {strides = array<i32>} : memref<8x1xf32, #tpu.memory_space<vmem>>, vector<8x1xf32>,
    %c0_19 = arith.constant 0 : index
    %c0_20 = arith.constant 0 : index
    %41 = vector.load %arg9[%c0_19, %c0_20] : memref<8x32xf32, #tpu.memory_space<vmem>>, vector<8x32xf32>
    %cst_21 = arith.constant dense<0.000000e+00> : vector<8x32xf32>
    %42 = tpu.matmul %35, %15, %cst_21 {dimension_numbers = #tpu.dot_dimension_numbers<[1], [0], [0], [1], [0, 0, 1, 1], [], []>} : vector<8x64xf32>, vector<64x32xf32>, vector<8x32xf32> -> vector<8x32xf32>
    %43 = arith.addf %41, %42 : vector<8x32xf32>
    %c0_22 = arith.constant 0 : index
    %c0_23 = arith.constant 0 : index
    %44 = vector.load %arg9[%c0_22, %c0_23] : memref<8x32xf32, #tpu.memory_space<vmem>>, vector<8x32xf32>
    tpu.vector_store %arg9[%c0_22, %c0_23], %43 {strides = array<i32>} : memref<8x32xf32, #tpu.memory_space<vmem>>, vector<8x32xf32>,
    %45 = arith.fptosi %30 : vector<1x64xf32> to vector<1x64xi32>
    %c0_24 = arith.constant 0 : index
    %c0_25 = arith.constant 0 : index
    %46 = vector.load %arg4[%c0_24, %c0_25] : memref<1x64xi32, #tpu.memory_space<vmem>>, vector<1x64xi32>
    tpu.vector_store %arg4[%c0_24, %c0_25], %45 {strides = array<i32>} : memref<1x64xi32, #tpu.memory_space<vmem>>, vector<1x64xi32>,
    %c0_i32_26 = arith.constant 0 : i32
    %47 = arith.cmpi eq, %arg1, %c0_i32_26 : i32
    %48 = arith.extui %47 : i1 to i32
    %c0_i32_27 = arith.constant 0 : i32
    %49 = arith.cmpi ne, %48, %c0_i32_27 : i32
    scf.if %49 {
      %c0_30 = arith.constant 0 : index
      %c0_31 = arith.constant 0 : index
      %55 = vector.load %arg10[%c0_30, %c0_31] : memref<8x1xf32, #tpu.memory_space<vmem>>, vector<8x1xf32>
      %cst_32 = arith.constant 0.000000e+00 : f32
      %56 = vector.broadcast %cst_32 : f32 to vector<8x1xf32>
      %57 = arith.cmpf oeq, %55, %56 : vector<8x1xf32>
      %c0_33 = arith.constant 0 : index
      %c0_34 = arith.constant 0 : index
      %58 = vector.load %arg9[%c0_33, %c0_34] : memref<8x32xf32, #tpu.memory_space<vmem>>, vector<8x32xf32>
      %cst_35 = arith.constant 1.000000e+00 : f32
      %59 = vector.broadcast %cst_35 : f32 to vector<8x1xf32>
      %60 = arith.select %57, %59, %55 : vector<8x1xi1>, vector<8x1xf32>
      %61 = vector.broadcast %60 : vector<8x1xf32> to vector<8x32xf32>
      %62 = arith.divf %58, %61 : vector<8x32xf32>
      %c0_36 = arith.constant 0 : index
      %c0_37 = arith.constant 0 : index
      %63 = vector.load %arg7[%c0_36, %c0_37] : memref<8x32xf32, #tpu.memory_space<vmem>>, vector<8x32xf32>
      tpu.vector_store %arg7[%c0_36, %c0_37], %62 {strides = array<i32>} : memref<8x32xf32, #tpu.memory_space<vmem>>, vector<8x32xf32>,
      %64 = arith.mulf %62, %62 : vector<8x32xf32>
      %cst_38 = arith.constant dense<0.000000e+00> : vector<8xf32>
      %65 = vector.multi_reduction <add>, %64, %cst_38 [1] : vector<8x32xf32> to vector<8xf32>
      %66 = vector.shape_cast %65 : vector<8xf32> to vector<8x1xf32>
      %cst_39 = arith.constant 5.000000e-01 : f32
      %67 = vector.broadcast %cst_39 : f32 to vector<8x1xf32>
      %68 = arith.mulf %67, %66 : vector<8x1xf32>
      %69 = arith.ori %57, %3 : vector<8x1xi1>
      %cst_40 = arith.constant 0x7F800000 : f32
      %cst_41 = arith.constant 0.000000e+00 : f32
      %70 = vector.broadcast %cst_40 : f32 to vector<8x1xf32>
      %71 = vector.broadcast %cst_41 : f32 to vector<8x1xf32>
      %72 = arith.select %69, %70, %71 : vector<8x1xi1>, vector<8x1xf32>
      %73 = arith.addf %68, %72 : vector<8x1xf32>
      %c0_42 = arith.constant 0 : index
      %c0_43 = arith.constant 0 : index
      %74 = vector.load %arg8[%c0_42, %c0_43] : memref<8x1xf32, #tpu.memory_space<vmem>>, vector<8x1xf32>
      tpu.vector_store %arg8[%c0_42, %c0_43], %73 {strides = array<i32>} : memref<8x1xf32, #tpu.memory_space<vmem>>, vector<8x1xf32>,
    } else {
    }
    %c9_i32 = arith.constant 9 : i32
    %50 = arith.cmpi eq, %arg0, %c9_i32 : i32
    %c0_i32_28 = arith.constant 0 : i32
    %51 = arith.cmpi eq, %arg1, %c0_i32_28 : i32
    %52 = arith.andi %50, %51 : i1
    %53 = arith.extui %52 : i1 to i32
    %c0_i32_29 = arith.constant 0 : i32
    %54 = arith.cmpi ne, %53, %c0_i32_29 : i32
    scf.if %54 {
      %c0_30 = arith.constant 0 : index
      %c0_31 = arith.constant 0 : index
      %55 = vector.load %arg10[%c0_30, %c0_31] : memref<8x1xf32, #tpu.memory_space<vmem>>, vector<8x1xf32>
      %c0_32 = arith.constant 0 : index
      %c0_33 = arith.constant 0 : index
      %56 = vector.load %arg9[%c0_32, %c0_33] : memref<8x32xf32, #tpu.memory_space<vmem>>, vector<8x32xf32>
      %57 = vector.broadcast %55 : vector<8x1xf32> to vector<8x32xf32>
      %58 = arith.divf %56, %57 : vector<8x32xf32>
      %c0_34 = arith.constant 0 : index
      %c0_35 = arith.constant 0 : index
      %59 = vector.load %arg5[%c0_34, %c0_35] : memref<8x32xf32, #tpu.memory_space<vmem>>, vector<8x32xf32>
      tpu.vector_store %arg5[%c0_34, %c0_35], %58 {strides = array<i32>} : memref<8x32xf32, #tpu.memory_space<vmem>>, vector<8x32xf32>,
      %c0_36 = arith.constant 0 : index
      %c0_37 = arith.constant 0 : index
      %60 = vector.load %arg6[%c0_36, %c0_37] : memref<8x1xf32, #tpu.memory_space<vmem>>, vector<8x1xf32>
      tpu.vector_store %arg6[%c0_36, %c0_37], %55 {strides = array<i32>} : memref<8x1xf32, #tpu.memory_space<vmem>>, vector<8x1xf32>,
    } else {
    }
    return
  }
  func.func @transform_0(%arg0: i32, %arg1: i32) -> (i32, i32) {
    %c0_i32 = arith.constant 0 : i32
    %c0_i32_0 = arith.constant 0 : i32
    return %arg1, %c0_i32 : i32, i32
  }
  func.func @transform_1(%arg0: i32, %arg1: i32) -> (i32, i32) {
    %c0_i32 = arith.constant 0 : i32
    %c0_i32_0 = arith.constant 0 : i32
    %c0_i32_1 = arith.constant 0 : i32
    return %c0_i32, %c0_i32_0 : i32, i32
  }
  func.func @transform_2(%arg0: i32, %arg1: i32) -> (i32, i32) {
    %c0_i32 = arith.constant 0 : i32
    %c0_i32_0 = arith.constant 0 : i32
    return %c0_i32, %arg1 : i32, i32
  }
  func.func @transform_3(%arg0: i32, %arg1: i32) -> (i32, i32) {
    %c0_i32 = arith.constant 0 : i32
    %c0_i32_0 = arith.constant 0 : i32
    %c0_i32_1 = arith.constant 0 : i32
    return %c0_i32, %c0_i32_0 : i32, i32
  }
  func.func @transform_4(%arg0: i32, %arg1: i32) -> (i32, i32) {
    %c0_i32 = arith.constant 0 : i32
    %c0_i32_0 = arith.constant 0 : i32
    %c0_i32_1 = arith.constant 0 : i32
    return %c0_i32, %c0_i32_0 : i32, i32
  }
}

</mosaic_0001>

<llo_original>
// kernel: tpu_custom_call.1
$region0: #{tpu_custom_call.1}
  #allocation0 [shape = 'u32[]', space=smem, size = 0x4, offset = 0x4, fixed_abs, tag = 'smem constant byte address 0x4 - core index']
  #allocation1 [shape = 'u32[72,128]{1,0:T(1,128)}', space=vmem, size = 0x9000, scoped, tag = 'internal scratch']
  #allocation2 [shape = 'f32[8,32]{1,0:T(8,128)}', space=vmem, size = 0x1000, scoped, tag = 'scratch operand']
  #allocation3 [shape = 'f32[8,1]{1,0:T(8,128)}', space=vmem, size = 0x1000, scoped, tag = 'scratch operand']
  #allocation4 [shape = 'f32[8,32]{1,0:T(8,128)}', space=vmem, size = 0x1000, scoped, tag = 'scratch operand']
  #allocation5 [shape = 'f32[8,1]{1,0:T(8,128)}', space=vmem, size = 0x1000, scoped, tag = 'scratch operand']
  %s0 = inlined_call_operand.vmem [shape: f32[64,32], index: 0, kind: input, shape index: {}]
  %s1 = inlined_call_operand.vmem [shape: f32[8,32], index: 1, kind: input, shape index: {}]
  %s2 = inlined_call_operand.hbm [shape: s32[1,64], index: 2, kind: output, shape index: {0}]
  %s3 = inlined_call_operand.hbm [shape: f32[8,32], index: 3, kind: output, shape index: {1}]
  %s4 = inlined_call_operand.vmem [shape: f32[8,1], index: 4, kind: output, shape index: {2}]
  %5 = xla_tuple %s2, %s3, %s4
  %s6 = sld [smem:[#allocation0]]
  $region73: #{tpu_custom_call.1} parent=0
    _
  %s8 = ssub.s32 1, %s6
  %s9 = scalar_select 0, %s8, %s6
  $region1: #{tpu_custom_call.1} parent=0
    #allocation6 [shape = 'u8[512]{0}', space=vmem, size = 0x400, scoped, tag = 'output window, operand 0, single buffered']
    #allocation7 [shape = 's32[2]{0}', space=sflag, size = 0x8, scoped, tag = 'scoped memory for tpu_custom_call.1']
    #allocation8 [shape = 'u8[4096]{0}', space=vmem, size = 0x1000, scoped, tag = 'output window, operand 1, single buffered']
    #allocation9 [shape = 's32[1]{0}', space=sflag, size = 0x4, scoped, tag = 'scoped memory for tpu_custom_call.1']
    %10 = vsyncpa [#allocation7], 0
    %11 = vsyncpa [#allocation9], 0
    loop: start=0, step=1, limit=12
    $region2: #{tpu_custom_call.1} parent=1 // loop_pre_header
      _
    $region3: #{tpu_custom_call.1} parent=1 // loop_header
      %s13 = sphi 0, %s17
      %p14 = scmp.ge.s32.totalorder %s13, 12
      %s20 = sphi 0, %s32
      %s21 = sphi 0, %s28
      %s22 = sphi 0, %s20
      %s23 = sphi 0, %s21
      %s24 = sphi 0, %s22
      %s25 = sphi 0, %s23
      %s35 = sphi 0, %s37
      %s38 = sphi 0, %s35
      %s39 = sphi 0, %s38
      %s55 = sphi 0, %s39
      %s59 = sphi 0, %s59
      %s61 = sphi 0, %s59
      %s62 = sphi 0, %s61
      %s76 = sphi 0, %s62
      %s82 = sphi 0, %s84
      %s85 = sphi 0, %s82
      %s86 = sphi 0, %s85
      %s102 = sphi 0, %s86
      %s106 = sphi 0, %s106
      %s108 = sphi 0, %s106
      %s109 = sphi 0, %s108
      %s123 = sphi 0, %s109
      %s127 = sphi 0, %s127
      %s129 = sphi 0, %s127
      %s130 = sphi 0, %s129
      %s144 = sphi 0, %s130
    $region4: #{tpu_custom_call.1} parent=1 // loop_header_branch
      %16 = sbr.rel (%p14) target = $region8
    $region5: #{tpu_custom_call.1} parent=1 // loop_body
      %s18 = ssub.s32 %s13, 1
      %s19 = ssub.s32 %s13, 2
      %s26 = sadd.s32 1, %s21
      %p27 = scmp.ge.s32.totalorder %s26, 1
      %s28 = scalar_select %p27, 0, %s26
      %s29 = sadd.s32 1, %s20
      %s30 = scalar_select %p27, %s29, %s20
      %p31 = scmp.ge.s32.totalorder %s30, 10
      %s32 = scalar_select %p31, 0, %s30
      %s33 = ssub.s32 %s21, %s28
      %p34 = scmp.eq.s32.totalorder %s33, 0
      %s36 = sadd.s32 %s35, 1
      %s37 = scalar_select %p34, %s35, %s36
      %p40 = pneg %p34
      %p41 = scmp.eq.s32.totalorder %s13, 9
      %p42 = por %p40, %p41
      %p43 = scmp.ne.s32.totalorder %s35, %s38
      %p44 = scmp.eq.s32.totalorder %s13, 0
      %p45 = por %p43, %p44
      %p46 = scmp.ne.s32.totalorder %s35, %s38
      %p47 = scmp.eq.s32.totalorder %s18, 9
      %p48 = por %p46, %p47
      %p49 = scmp.ne.s32.totalorder %s38, %s39
      %p50 = scmp.eq.s32.totalorder %s18, 0
      %p51 = por %p49, %p50
      %p52 = scmp.ne.s32.totalorder %s38, %s39
      %p53 = scmp.eq.s32.totalorder %s19, 9
      %p54 = por %p52, %p53
      %p56 = scmp.ne.s32.totalorder %s39, %s55
      %p57 = scmp.eq.s32.totalorder %s19, 0
      %p58 = por %p56, %p57
      %s60 = sadd.s32 %s59, 1
      %p63 = scmp.eq.s32.totalorder %s13, 9
      %p64 = scmp.ne.s32.totalorder %s59, %s61
      %p65 = scmp.eq.s32.totalorder %s13, 0
      %p66 = por %p64, %p65
      %p67 = scmp.ne.s32.totalorder %s59, %s61
      %p68 = scmp.eq.s32.totalorder %s18, 9
      %p69 = por %p67, %p68
      %p70 = scmp.ne.s32.totalorder %s61, %s62
      %p71 = scmp.eq.s32.totalorder %s18, 0
      %p72 = por %p70, %p71
      %p73 = scmp.ne.s32.totalorder %s61, %s62
      %p74 = scmp.eq.s32.totalorder %s19, 9
      %p75 = por %p73, %p74
      %p77 = scmp.ne.s32.totalorder %s62, %s76
      %p78 = scmp.eq.s32.totalorder %s19, 0
      %p79 = por %p77, %p78
      %s80 = ssub.s32 %s21, %s28
      %p81 = scmp.eq.s32.totalorder %s80, 0
      %s83 = sadd.s32 %s82, 1
      %s84 = scalar_select %p81, %s82, %s83
      %p87 = pneg %p81
      %p88 = scmp.eq.s32.totalorder %s13, 9
      %p89 = por %p87, %p88
      %p90 = scmp.ne.s32.totalorder %s82, %s85
      %p91 = scmp.eq.s32.totalorder %s13, 0
      %p92 = por %p90, %p91
      %p93 = scmp.ne.s32.totalorder %s82, %s85
      %p94 = scmp.eq.s32.totalorder %s18, 9
      %p95 = por %p93, %p94
      %p96 = scmp.ne.s32.totalorder %s85, %s86
      %p97 = scmp.eq.s32.totalorder %s18, 0
      %p98 = por %p96, %p97
      %p99 = scmp.ne.s32.totalorder %s85, %s86
      %p100 = scmp.eq.s32.totalorder %s19, 9
      %p101 = por %p99, %p100
      %p103 = scmp.ne.s32.totalorder %s86, %s102
      %p104 = scmp.eq.s32.totalorder %s19, 0
      %p105 = por %p103, %p104
      %s107 = sadd.s32 %s106, 1
      %p110 = scmp.eq.s32.totalorder %s13, 9
      %p111 = scmp.ne.s32.totalorder %s106, %s108
      %p112 = scmp.eq.s32.totalorder %s13, 0
      %p113 = por %p111, %p112
      %p114 = scmp.ne.s32.totalorder %s106, %s108
      %p115 = scmp.eq.s32.totalorder %s18, 9
      %p116 = por %p114, %p115
      %p117 = scmp.ne.s32.totalorder %s108, %s109
      %p118 = scmp.eq.s32.totalorder %s18, 0
      %p119 = por %p117, %p118
      %p120 = scmp.ne.s32.totalorder %s108, %s109
      %p121 = scmp.eq.s32.totalorder %s19, 9
      %p122 = por %p120, %p121
      %p124 = scmp.ne.s32.totalorder %s109, %s123
      %p125 = scmp.eq.s32.totalorder %s19, 0
      %p126 = por %p124, %p125
      %s128 = sadd.s32 %s127, 1
      %p131 = scmp.eq.s32.totalorder %s13, 9
      %p132 = scmp.ne.s32.totalorder %s127, %s129
      %p133 = scmp.eq.s32.totalorder %s13, 0
      %p134 = por %p132, %p133
      %p135 = scmp.ne.s32.totalorder %s127, %s129
      %p136 = scmp.eq.s32.totalorder %s18, 9
      %p137 = por %p135, %p136
      %p138 = scmp.ne.s32.totalorder %s129, %s130
      %p139 = scmp.eq.s32.totalorder %s18, 0
      %p140 = por %p138, %p139
      %p141 = scmp.ne.s32.totalorder %s129, %s130
      %p142 = scmp.eq.s32.totalorder %s19, 9
      %p143 = por %p141, %p142
      %p145 = scmp.ne.s32.totalorder %s130, %s144
      %p146 = scmp.eq.s32.totalorder %s19, 0
      %p147 = por %p145, %p146
      %p148 = scmp.le.s32.totalorder 1, %s13
      %p149 = scmp.lt.s32.totalorder %s13, 11
      %p150 = pnand %p148, %p149
      %p151 = pneg %p150
      // Predicated region
      $region9: #{tpu_custom_call.1} parent=5 // pred_check
        _
      $region10: #{tpu_custom_call.1} parent=5 // pred_check_branch
        %153 = sbr.rel (%p150) target = $region12
      $region11: #{tpu_custom_call.1} parent=5 // pred_region
        %s154 = ssub.s32 %s13, 1
        // Predicated region
        $region13: #{tpu_custom_call.1} parent=11 // pred_check
          %p155 = pneg %p51
        $region14: #{tpu_custom_call.1} parent=11 // pred_check_branch
          %157 = sbr.rel (%p155) target = $region16
        $region15: #{tpu_custom_call.1} parent=11 // pred_region
          %s158 = smul.u32 8, %s23
          %p159 = scmp.lt.s32.totalorder %s158, 7
          %s160 = scalar_select %p159, %s158, 7
          %s161 = smul.addr %s160, 8
          %s162 = scalar_lea.vmem %s0, %s161
          %s163 = smul.u32 8, %s23
        $region16: #{tpu_custom_call.1} parent=11 // pred_fallthru
          _
        // Predicated region
        $region17: #{tpu_custom_call.1} parent=11 // pred_check
          %p164 = pneg %p72
        $region18: #{tpu_custom_call.1} parent=11 // pred_check_branch
          %166 = sbr.rel (%p164) target = $region20
        $region19: #{tpu_custom_call.1} parent=11 // pred_region
          _
        $region20: #{tpu_custom_call.1} parent=11 // pred_fallthru
          _
      $region12: #{tpu_custom_call.1} parent=5 // pred_fallthru
        _
      %p167 = scmp.lt.s32.totalorder %s13, 10
      // Predicated region
      $region21: #{tpu_custom_call.1} parent=5 // pred_check
        %p168 = pneg %p167
      $region22: #{tpu_custom_call.1} parent=5 // pred_check_branch
        %170 = sbr.rel (%p168) target = $region24
      $region23: #{tpu_custom_call.1} parent=5 // pred_region
        _
      $region24: #{tpu_custom_call.1} parent=5 // pred_fallthru
        _
      %p171 = scmp.le.s32.totalorder 1, %s13
      %p172 = scmp.lt.s32.totalorder %s13, 11
      %p173 = pnand %p171, %p172
      %p174 = pneg %p173
      // Predicated region
      $region25: #{tpu_custom_call.1} parent=5 // pred_check
        _
      $region26: #{tpu_custom_call.1} parent=5 // pred_check_branch
        %176 = sbr.rel (%p173) target = $region28
      $region27: #{tpu_custom_call.1} parent=5 // pred_region
        %s177 = ssub.s32 %s13, 1
        %s178 = smul.u32 8, %s23
        %p179 = scmp.lt.s32.totalorder %s178, 7
        %s180 = scalar_select %p179, %s178, 7
        %s181 = smul.addr %s180, 8
        %s182 = scalar_lea.vmem %s0, %s181
        %p183 = pneg %p51
        %p184 = pneg %p48
        %p185 = pneg %p72
        %p186 = pneg %p69
        %p187 = pneg %p98
        %p188 = pneg %p95
        %p189 = pneg %p119
        %p190 = pneg %p116
        %p191 = pneg %p140
        %p192 = pneg %p137
        %s193 = smul.u32 8, %s23
        %p194 = scmp.lt.s32.totalorder %s193, 7
        %s195 = scalar_select %p194, %s193, 7
        %s196 = smul.addr %s195, 8
        %s197 = scalar_lea.vmem %s0, %s196
        %s198 = smul.u32 8, %s23
        %v199 = vlaneseq
        %v200 = vshrl.u32 %v199, 7
        %v201 = vcvt.s32.f32 %v200
        %vm202 = vcmp.ge.s32.totalorder %v200, 8
        %v203 = vsel %vm202, inf, 0.0
        %p204 = scmp.eq.s32.totalorder %s22, 0
        %p205 = scmp.eq.s32.totalorder %s23, 0
        %p206 = pnand %p204, %p205
        %p207 = pneg %p206
        // Predicated region
        $region29: #{tpu_custom_call.1} parent=27 // pred_check
          _
        $region30: #{tpu_custom_call.1} parent=27 // pred_check_branch
          %209 = sbr.rel (%p206) target = $region32
        $region31: #{tpu_custom_call.1} parent=27 // pred_region
          %v210 = vld [vmem:[%s1] sm:$0xff]
          %vm211 = vcmask 261120
          %212 = vst.msk [vmem:[#allocation2] sm:$0xff] %vm211, %v210
          %v213 = vmul.f32 %v210, %v210
          %v214 = vsel %vm211, %v213, 0.0
          %215 = vadd.xlane.f32.xlu0 %v214
          %v216 = vpop.xlane.xlu0 %215
          %v217 = vmul.f32 %v216, 0.5
          %v218 = vadd.f32 %v217, %v203
          %vm219 = vcmask 7168
          %220 = vst.msk [vmem:[#allocation3] sm:$0xff] %vm219, %v218
        $region32: #{tpu_custom_call.1} parent=27 // pred_fallthru
          _
        // Predicated region
        $region33: #{tpu_custom_call.1} parent=27 // pred_check
          %p221 = pneg %p205
        $region34: #{tpu_custom_call.1} parent=27 // pred_check_branch
          %223 = sbr.rel (%p221) target = $region36
        $region35: #{tpu_custom_call.1} parent=27 // pred_region
          %vm224 = vcmask 261120
          %225 = vst.msk [vmem:[#allocation4] sm:$0xff] %vm224, 0.0
          %vm226 = vcmask 7168
          %227 = vst.msk [vmem:[#allocation5] sm:$0xff] %vm226, 0.0
        $region36: #{tpu_custom_call.1} parent=27 // pred_fallthru
          _
        %v228 = vld [vmem:[%s197] sm:$0xff]
        %v229 = vld [vmem:[%s197 + $0x8] sm:$0xff]
        %v230 = vld [vmem:[%s197 + $0x10] sm:$0xff]
        %v231 = vld [vmem:[%s197 + $0x18] sm:$0xff]
        %v232 = vld [vmem:[%s197 + $0x20] sm:$0xff]
        %v233 = vld [vmem:[%s197 + $0x28] sm:$0xff]
        %v234 = vld [vmem:[%s197 + $0x30] sm:$0xff]
        %v235 = vld [vmem:[%s197 + $0x38] sm:$0xff]
        %v236 = vld [vmem:[#allocation2] sm:$0xff]
        %vm237 = vcmask 261120
        %v239 = vsel %vm237, %v236, 0
        %v242 = vsel %vm237, %v228, 0
        %v245 = vsel %vm237, %v229, 0
        %v248 = vsel %vm237, %v230, 0
        %v251 = vsel %vm237, %v231, 0
        %v254 = vsel %vm237, %v232, 0
        %v257 = vsel %vm237, %v233, 0
        %v260 = vsel %vm237, %v234, 0
        %v263 = vsel %vm237, %v235, 0
        %265 = vmatpush.xpose.msra.mxu0 0.0
        %266 = vmatpush.xpose.msra.mxu0 0.0
        %267 = vmatpush.xpose.msra.mxu0 0.0
        %268 = vmatpush.xpose.msra.mxu0 0.0
        %269 = vmatpush.xpose.msra.mxu0 0.0
        %270 = vmatpush.xpose.msra.mxu0 0.0
        %271 = vmatpush.xpose.msra.mxu0 0.0
        %272 = vmatpush.xpose.msra.mxu0 0.0
        %273 = vmatpush.xpose.msra.mxu0 %v263
        %274 = vmatpush.xpose.msra.mxu0 %v260
        %275 = vmatpush.xpose.msra.mxu0 %v257
        %276 = vmatpush.xpose.msra.mxu0 %v254
        %277 = vmatpush.xpose.msra.mxu0 %v251
        %278 = vmatpush.xpose.msra.mxu0 %v248
        %279 = vmatpush.xpose.msra.mxu0 %v245
        %280 = vmatpush.xpose.msra.mxu0 %v242
        %281 = vmatmul.f32.gmra.mxu0 %v239
        %v282 = vpop.f32.mrf.mxu0
        %v283 = vadd.f32 0.0, %v282
        %284 = vdwg.mxu0
        %v285 = vld [vmem:[#allocation3] sm:$0xff]
        %287 = vset.pattern.permute.xlu0 0
        %288 = vperm.xlu0 %287, %v285
        %v289 = vpop.permute.xlu0 %288
        %v291 = vsub.f32 %v289, %v283
        %vm292 = vcmask 523264
        %v293 = vsel %vm292, %v291, inf
        %v294 = vrot.slane %v293, 4
        %v295 = vmin.f32 %v293, %v294
        %v296 = vrot.slane %v295, 2
        %v297 = vmin.f32 %v295, %v296
        %v298 = vrot.slane %v297, 1
        %v299 = vmin.f32 %v297, %v298
        %vm300 = vcmp.le.f32.partialorder %v291, %v299
        %v301 = vsel %vm300, %v201, 8.0
        %v302 = vsel %vm292, %v301, inf
        %v303 = vrot.slane %v302, 4
        %v304 = vmin.f32 %v302, %v303
        %v305 = vrot.slane %v304, 2
        %v306 = vmin.f32 %v304, %v305
        %v307 = vrot.slane %v306, 1
        %v308 = vmin.f32 %v306, %v307
        %vm309 = vcmp.eq.f32.partialorder %v201, %v308
        %v310 = vsel %vm309, 1, 0
        %v311 = vcvt.s32.f32 %v310
        %v312 = vld [vmem:[#allocation5] sm:$0xff]
        %v313 = vsel %vm292, %v311, 0.0
        %314 = vadd.xlane.f32.xlu0 %v313
        %v315 = vpop.xlane.xlu0 %314
        %v316 = vadd.f32 %v312, %v315
        %vm317 = vcmask 7168
        %318 = vst.msk [vmem:[#allocation5] sm:$0xff] %vm317, %v316
        %v319 = vld [vmem:[#allocation4] sm:$0xff]
        %v321 = vsel %vm292, %v311, 0
        %323 = vmatpush.msra.mxu0 0.0
        %324 = vmatpush.msra.mxu0 0.0
        %325 = vmatpush.msra.mxu0 0.0
        %326 = vmatpush.msra.mxu0 0.0
        %327 = vmatpush.msra.mxu0 0.0
        %328 = vmatpush.msra.mxu0 0.0
        %329 = vmatpush.msra.mxu0 0.0
        %330 = vmatpush.msra.mxu0 0.0
        %331 = vmatpush.msra.mxu0 %v235
        %332 = vmatpush.msra.mxu0 %v234
        %333 = vmatpush.msra.mxu0 %v233
        %334 = vmatpush.msra.mxu0 %v232
        %335 = vmatpush.msra.mxu0 %v231
        %336 = vmatpush.msra.mxu0 %v230
        %337 = vmatpush.msra.mxu0 %v229
        %338 = vmatpush.msra.mxu0 %v228
        %339 = vmatmul.f32.gmra.mxu0 %v321
        %v340 = vpop.f32.mrf.mxu0
        %v341 = vadd.f32 0.0, %v340
        %342 = vdwg.mxu0
        %v343 = vadd.f32 %v319, %v341
        %344 = vst.msk [vmem:[#allocation4] sm:$0xff] %vm237, %v343
        %v345 = vcvt.f32.s32.to.zero.pseudo %v308
        %vm346 = vcmask 516096
        %347 = vst.msk [vmem:[#allocation6] sm:$0x1] %vm346, %v345
        // Predicated region
        $region37: #{tpu_custom_call.1} parent=27 // pred_check
          %p348 = pneg %p205
        $region38: #{tpu_custom_call.1} parent=27 // pred_check_branch
          %350 = sbr.rel (%p348) target = $region40
        $region39: #{tpu_custom_call.1} parent=27 // pred_region
          %v351 = vld [vmem:[#allocation5] sm:$0xff]
          %vm352 = vcmp.eq.f32.partialorder %v351, 0.0
          %v353 = vld [vmem:[#allocation4] sm:$0xff]
          %v354 = vsel %vm352, 1.0, %v351
          %356 = vset.pattern.permute.xlu0 0
          %357 = vperm.xlu0 %356, %v354
          %v358 = vpop.permute.xlu0 %357
          %v360 = vrcp.pop %v358
          %v361 = vmul.f32 %v358, %v360
          %v362 = vsub.f32 1.0, %v361
          %v363 = vmul.f32 %v360, %v362
          %v364 = vadd.f32 %v360, %v363
          %vm365 = vweird.f32 %v358
          %vm366 = vweird.f32 %v360
          %vm367 = vmor %vm365, %vm366
          %v368 = vsel %vm367, %v360, %v364
          %v369 = vand.u32 2147483647, %v358
          %vm370 = vcmp.eq.f32.partialorder %v369, 8.507059e+37
          %v371 = vand.u32 %v358, 2147483648
          %v372 = vor.u32 1.1754944e-38, %v371
          %v373 = vsel %vm370, %v372, %v368
          %v374 = vmul.f32 %v353, %v373
          %375 = vst.msk [vmem:[#allocation2] sm:$0xff] %vm237, %v374
          %v376 = vmul.f32 %v374, %v374
          %v377 = vsel %vm237, %v376, 0.0
          %378 = vadd.xlane.f32.xlu0 %v377
          %v379 = vpop.xlane.xlu0 %378
          %v380 = vmul.f32 %v379, 0.5
          %vm381 = vmor %vm352, %vm202
          %v382 = vsel %vm381, inf, 0.0
          %v383 = vadd.f32 %v380, %v382
          %384 = vst.msk [vmem:[#allocation3] sm:$0xff] %vm317, %v383
        $region40: #{tpu_custom_call.1} parent=27 // pred_fallthru
          _
        %p385 = scmp.eq.s32.totalorder %s22, 9
        %p386 = pnand %p385, %p205
        %p387 = pneg %p386
        // Predicated region
        $region41: #{tpu_custom_call.1} parent=27 // pred_check
          _
        $region42: #{tpu_custom_call.1} parent=27 // pred_check_branch
          %389 = sbr.rel (%p386) target = $region44
        $region43: #{tpu_custom_call.1} parent=27 // pred_region
          %v390 = vld [vmem:[#allocation5] sm:$0xff]
          %v391 = vld [vmem:[#allocation4] sm:$0xff]
          %393 = vset.pattern.permute.xlu0 0
          %394 = vperm.xlu0 %393, %v390
          %v395 = vpop.permute.xlu0 %394
          %v397 = vrcp.pop %v395
          %v398 = vmul.f32 %v395, %v397
          %v399 = vsub.f32 1.0, %v398
          %v400 = vmul.f32 %v397, %v399
          %v401 = vadd.f32 %v397, %v400
          %vm402 = vweird.f32 %v395
          %vm403 = vweird.f32 %v397
          %vm404 = vmor %vm402, %vm403
          %v405 = vsel %vm404, %v397, %v401
          %v406 = vand.u32 2147483647, %v395
          %vm407 = vcmp.eq.f32.partialorder %v406, 8.507059e+37
          %v408 = vand.u32 %v395, 2147483648
          %v409 = vor.u32 1.1754944e-38, %v408
          %v410 = vsel %vm407, %v409, %v405
          %v411 = vmul.f32 %v391, %v410
          %412 = vst.msk [vmem:[#allocation8] sm:$0xff] %vm237, %v411
          %413 = vst.msk [vmem:[%s4] sm:$0xff] %vm317, %v390
        $region44: #{tpu_custom_call.1} parent=27 // pred_fallthru
          _
        // Predicated region
        $region45: #{tpu_custom_call.1} parent=27 // pred_check
          %p414 = pneg %p95
        $region46: #{tpu_custom_call.1} parent=27 // pred_check_branch
          %416 = sbr.rel (%p414) target = $region48
        $region47: #{tpu_custom_call.1} parent=27 // pred_region
          %418 = vsyncadd [#allocation7], 0
          %s419 = scalar_lea.hbm %s2, %s23
          %s421 = sshll.u32 [#allocation6], 4
          %s422 = int_to_ptr.vmem [resolvable:$true] %s421
          %s423 = sshll.u32 %s419, 4
          %s424 = int_to_ptr.hbm [resolvable:$true] %s423
          %426 = dma.vmem_to_hbm [thread:$0]  %s422, 16, %s424, [#allocation7]
        $region48: #{tpu_custom_call.1} parent=27 // pred_fallthru
          _
        // Predicated region
        $region49: #{tpu_custom_call.1} parent=27 // pred_check
          %p427 = pneg %p116
        $region50: #{tpu_custom_call.1} parent=27 // pred_check_branch
          %429 = sbr.rel (%p427) target = $region52
        $region51: #{tpu_custom_call.1} parent=27 // pred_region
          %431 = vsyncadd [#allocation9], 0
          %s433 = sshll.u32 [#allocation8], 4
          %s434 = int_to_ptr.vmem [resolvable:$true] %s433
          %s435 = sshll.u32 %s3, 4
          %s436 = int_to_ptr.hbm [resolvable:$true] %s435
          %438 = dma.vmem_to_hbm [thread:$0]  %s434, 128, %s436, [#allocation9]
        $region52: #{tpu_custom_call.1} parent=27 // pred_fallthru
          _
        // Predicated region
        $region53: #{tpu_custom_call.1} parent=27 // pred_check
          %p439 = pneg %p137
        $region54: #{tpu_custom_call.1} parent=27 // pred_check_branch
          %441 = sbr.rel (%p439) target = $region56
        $region55: #{tpu_custom_call.1} parent=27 // pred_region
          _
        $region56: #{tpu_custom_call.1} parent=27 // pred_fallthru
          _
        // Predicated region
        $region57: #{tpu_custom_call.1} parent=27 // pred_check
          %p442 = pneg %p95
        $region58: #{tpu_custom_call.1} parent=27 // pred_check_branch
          %444 = sbr.rel (%p442) target = $region60
        $region59: #{tpu_custom_call.1} parent=27 // pred_region
          %446 = dma.done [#allocation7], 16
        $region60: #{tpu_custom_call.1} parent=27 // pred_fallthru
          _
        // Predicated region
        $region61: #{tpu_custom_call.1} parent=27 // pred_check
          %p447 = pneg %p116
        $region62: #{tpu_custom_call.1} parent=27 // pred_check_branch
          %449 = sbr.rel (%p447) target = $region64
        $region63: #{tpu_custom_call.1} parent=27 // pred_region
          %451 = dma.done [#allocation9], 128
        $region64: #{tpu_custom_call.1} parent=27 // pred_fallthru
          _
        // Predicated region
        $region65: #{tpu_custom_call.1} parent=27 // pred_check
          %p452 = pneg %p137
        $region66: #{tpu_custom_call.1} parent=27 // pred_check_branch
          %454 = sbr.rel (%p452) target = $region68
        $region67: #{tpu_custom_call.1} parent=27 // pred_region
          _
        $region68: #{tpu_custom_call.1} parent=27 // pred_fallthru
          _
      $region28: #{tpu_custom_call.1} parent=5 // pred_fallthru
        _
      %p455 = scmp.le.s32.totalorder 2, %s13
      // Predicated region
      $region69: #{tpu_custom_call.1} parent=5 // pred_check
        %p456 = pneg %p455
      $region70: #{tpu_custom_call.1} parent=5 // pred_check_branch
        %458 = sbr.rel (%p456) target = $region72
      $region71: #{tpu_custom_call.1} parent=5 // pred_region
        %s459 = ssub.s32 %s13, 2
      $region72: #{tpu_custom_call.1} parent=5 // pred_fallthru
        _
    $region6: #{tpu_custom_call.1} parent=1 // loop_footer
      %s17 = sadd.s32 1, %s13
    $region7: #{tpu_custom_call.1} parent=1 // loop_footer_branch
      %12 = sbr.rel target = $region3
    $region8: #{tpu_custom_call.1} parent=1 // loop_exit
      _
    %460 = vsyncpa [#allocation7], 1
    %s461 = scalar_lea.sflag [#allocation7], 1
    %462 = vsyncpa %s461, 1
    %463 = vsyncpa [#allocation9], 1

</llo_original>
